<compile_context>
chip_gen: v7x
topology: tpu7x:2x2x1
jax: 0.10.0
libtpu: 0.0.40
codegen_flags: <defaults>
</compile_context>

<pallas_src>
import jax
import jax.numpy as jnp
import numpy as np
from jax.experimental import pallas as pl
from jax.experimental.pallas import tpu as pltpu


def _round_up(x, m):
    return ((x + m - 1) // m) * m


# ----------------------------- kernel 1 -------------------------------------
def stats_kernel(x_ref, t_ref, c_ref, u_ref, v_ref):
    # x_ref: (1, C, TQ) logits block; t_ref: (1, 1, TQ) int32 targets.
    x = x_ref[0].astype(jnp.float32)                        # (C, TQ)
    m = jnp.max(x, axis=0, keepdims=True)                   # (1, TQ)
    s = jnp.sum(jnp.exp(x - m), axis=0, keepdims=True)      # (1, TQ)
    p = 1.0 / s                                             # max softmax prob

    # first-occurrence argmax over the class (sublane) axis
    num_classes = x.shape[0]
    idx = jax.lax.broadcasted_iota(jnp.int32, x.shape, 0)   # (C, TQ)
    pred = jnp.min(jnp.where(x == m, idx, num_classes), axis=0, keepdims=True)

    correct = (pred == t_ref[0]).astype(jnp.float32)        # (1, TQ)
    c_ref[0] = correct - p
    u_ref[0] = jnp.exp(-2.5 * p)                            # exp(-p/0.4)
    v_ref[0] = jnp.exp(2.5 * p)                             # exp(+p/0.4)


# ----------------------------- kernel 2 -------------------------------------
def pairwise_kernel(c_col_ref, u_col_ref, v_col_ref,
                    c_row_ref, u_row_ref, v_row_ref, o_ref):
    # col refs: (TM, 1); row refs: (1, TN); o_ref: (1, 8, 128) per-i partial.
    @pl.when(pl.program_id(1) == 0)
    def _():
        o_ref[...] = jnp.zeros_like(o_ref)

    c_col = c_col_ref[...]                                  # (TM, 1)
    u_col = u_col_ref[...]
    v_col = v_col_ref[...]
    tm = c_col.shape[0]
    tn = c_row_ref.shape[1]

    acc = jnp.zeros((8, 128), jnp.float32)
    # Strip-mine the (TM, TN) tile into (TM, 128) lane chunks so all
    # intermediates stay vreg-sized; fold each chunk into the (8, 128)
    # accumulator with vreg-aligned slices (pure VPU adds, no XLU).
    for b in range(tn // 128):
        lane_sl = slice(b * 128, (b + 1) * 128)
        c_r = c_row_ref[:, lane_sl]                         # (1, 128)
        u_r = u_row_ref[:, lane_sl]
        v_r = v_row_ref[:, lane_sl]
        # exp(-|p_i - p_j| / 0.4) == min(u_i * v_j, v_i * u_j)
        kern = jnp.minimum(u_col * v_r, v_col * u_r)        # (TM, 128)
        prod = (c_col * c_r) * kern                         # (TM, 128)
        for a in range(tm // 8):
            acc = acc + prod[a * 8:(a + 1) * 8, :]
    o_ref[0] += acc


# ------------------------------ wrapper -------------------------------------
def mmce_loss(logits_nchw, target, *, tq_max=2048, tm=128, tn_max=4096):
    """MMCE_m loss. logits_nchw: (B, C, H, W) float, target: (B, H, W) int."""
    B, C, H, W = logits_nchw.shape
    HW = H * W
    N = B * HW  # real sample count (denominator)

    # Channel-major layout: softmax over axis 1, samples along the lane axis.
    logits3 = logits_nchw.reshape(B, C, HW).astype(jnp.float32)
    tgt3 = target.reshape(B, 1, HW).astype(jnp.int32)

    # ---- kernel 1: per-sample stats (lane-dense, no transpose) ----------
    tq = min(tq_max, _round_up(HW, 128))
    HWp = _round_up(HW, tq)
    if HWp != HW:
        logits3 = jnp.pad(logits3, ((0, 0), (0, 0), (0, HWp - HW)))
        tgt3 = jnp.pad(tgt3, ((0, 0), (0, 0), (0, HWp - HW)),
                       constant_values=-1)

    stats_cost = pl.CostEstimate(
        flops=int(B * HWp * (6 * C + 8)),
        transcendentals=int(B * HWp * (C + 2)),
        bytes_accessed=int(4 * B * HWp * (C + 1 + 3)),
    )
    c3, u3, v3 = pl.pallas_call(
        stats_kernel,
        out_shape=(
            jax.ShapeDtypeStruct((B, 1, HWp), jnp.float32),
            jax.ShapeDtypeStruct((B, 1, HWp), jnp.float32),
            jax.ShapeDtypeStruct((B, 1, HWp), jnp.float32),
        ),
        grid=(B, HWp // tq),
        in_specs=[
            pl.BlockSpec((1, C, tq), lambda b, q: (b, 0, q)),
            pl.BlockSpec((1, 1, tq), lambda b, q: (b, 0, q)),
        ],
        out_specs=(
            pl.BlockSpec((1, 1, tq), lambda b, q: (b, 0, q)),
            pl.BlockSpec((1, 1, tq), lambda b, q: (b, 0, q)),
            pl.BlockSpec((1, 1, tq), lambda b, q: (b, 0, q)),
        ),
        compiler_params=pltpu.CompilerParams(
            dimension_semantics=("parallel", "parallel")),
        cost_estimate=stats_cost,
    )(logits3, tgt3)

    # Zero out padded spatial positions so they contribute nothing.
    if HWp != HW:
        valid = (jnp.arange(HWp) < HW)[None, None, :]
        c3 = jnp.where(valid, c3, 0.0)
        u3 = jnp.where(valid, u3, 0.0)
        v3 = jnp.where(valid, v3, 0.0)

    c = c3.reshape(-1)
    u = u3.reshape(-1)
    v = v3.reshape(-1)
    Nf = c.shape[0]                      # = B * HWp

    # ---- kernel 2: pairwise kernelized sum, 2-D tiled --------------------
    tn = min(tn_max, _round_up(Nf, tm))  # lane-side tile (multiple of tm=128)
    Np = _round_up(Nf, tn)               # padded row count (multiple of tm, tn)
    if Np != Nf:
        pad = Np - Nf
        c = jnp.pad(c, (0, pad))         # c = 0 -> zero contribution
        u = jnp.pad(u, (0, pad))
        v = jnp.pad(v, (0, pad))

    c_col, u_col, v_col = (a.reshape(Np, 1) for a in (c, u, v))
    c_row, u_row, v_row = (a.reshape(1, Np) for a in (c, u, v))

    num_i = Np // tm
    num_j = Np // tn
    pair_cost = pl.CostEstimate(
        flops=int(6 * Np * Np),
        transcendentals=0,
        bytes_accessed=int(3 * 4 * Np * (num_i + 1) + 4 * num_i * 8 * 128),
    )
    partials = pl.pallas_call(
        pairwise_kernel,
        out_shape=jax.ShapeDtypeStruct((num_i, 8, 128), jnp.float32),
        grid=(num_i, num_j),
        in_specs=[
            pl.BlockSpec((tm, 1), lambda i, j: (i, 0)),
            pl.BlockSpec((tm, 1), lambda i, j: (i, 0)),
            pl.BlockSpec((tm, 1), lambda i, j: (i, 0)),
            pl.BlockSpec((1, tn), lambda i, j: (0, j)),
            pl.BlockSpec((1, tn), lambda i, j: (0, j)),
            pl.BlockSpec((1, tn), lambda i, j: (0, j)),
        ],
        out_specs=pl.BlockSpec((1, 8, 128), lambda i, j: (i, 0, 0)),
        compiler_params=pltpu.CompilerParams(
            dimension_semantics=("parallel", "arbitrary")),
        cost_estimate=pair_cost,
    )(c_col, u_col, v_col, c_row, u_row, v_row)

    total = jnp.sum(partials)
    return total / (jnp.float32(N) * jnp.float32(N))


# ----------------------------- reference ------------------------------------
def mmce_ref(logits_nchw, target):
    B, C, H, W = logits_nchw.shape
    logits = (
        logits_nchw.reshape(B, C, H * W).transpose(0, 2, 1).reshape(-1, C)
    ).astype(jnp.float32)
    tgt = target.reshape(-1)
    probs = jax.nn.softmax(logits, axis=1)
    p = jnp.max(probs, axis=1)
    pred = jnp.argmax(probs, axis=1)
    correct = (pred == tgt).astype(jnp.float32)
    c = correct - p
    dot = c[:, None] * c[None, :]
    kern = jnp.exp(-jnp.abs(p[:, None] - p[None, :]) / 0.4)
    n = c.shape[0]
    return jnp.sum(dot * kern) / (jnp.float32(n) * jnp.float32(n))


if __name__ == "__main__":
    key = jax.random.PRNGKey(0)
    k1, k2 = jax.random.split(key)
    B, C, H, W = 2, 4, 16, 16                     # N = B*H*W = 512
    x = jax.random.normal(k1, (B, C, H, W), dtype=jnp.float32)
    target = jax.random.randint(k2, (B, H, W), 0, C, dtype=jnp.int32)

    loss = jax.block_until_ready(mmce_loss(x, target))
    ref = jax.block_until_ready(mmce_ref(x, target))
    np.testing.assert_allclose(np.asarray(loss), np.asarray(ref),
                               rtol=1e-4, atol=1e-6)
    print("KERNEL_OK")
</pallas_src>

<mosaic_0001>
module attributes {stable_mosaic.version = 11 : i64} {
  func.func @stats_kernel(%arg0: i32, %arg1: i32, %arg2: memref<1x4x256xf32, #tpu.memory_space<vmem>>, %arg3: memref<1x1x256xi32, #tpu.memory_space<vmem>>, %arg4: memref<1x1x256xf32, #tpu.memory_space<vmem>>, %arg5: memref<1x1x256xf32, #tpu.memory_space<vmem>>, %arg6: memref<1x1x256xf32, #tpu.memory_space<vmem>>) attributes {dimension_semantics = [#tpu.dimension_semantics<parallel>, #tpu.dimension_semantics<parallel>], iteration_bounds = array<i64: 2, 1>, scalar_prefetch = 0 : i64, scratch_operands = 0 : i64, tpu.core_type = #tpu.core_type<tc>, window_params = [{transform_indices = @transform_0, window_bounds = array<i64: 1, 4, 256>}, {transform_indices = @transform_1, window_bounds = array<i64: 1, 1, 256>}, {transform_indices = @transform_2, window_bounds = array<i64: 1, 1, 256>}, {transform_indices = @transform_3, window_bounds = array<i64: 1, 1, 256>}, {transform_indices = @transform_4, window_bounds = array<i64: 1, 1, 256>}]} {
    %c0 = arith.constant 0 : index
    %c0_0 = arith.constant 0 : index
    %c0_1 = arith.constant 0 : index
    %0 = vector.load %arg2[%c0, %c0_0, %c0_1] : memref<1x4x256xf32, #tpu.memory_space<vmem>>, vector<1x4x256xf32>
    %1 = vector.shape_cast %0 : vector<1x4x256xf32> to vector<4x256xf32>
    %cst = arith.constant dense<0xFF800000> : vector<256xf32>
    %2 = vector.multi_reduction <maximumf>, %1, %cst [0] : vector<4x256xf32> to vector<256xf32>
    %3 = vector.shape_cast %2 : vector<256xf32> to vector<1x256xf32>
    %4 = vector.broadcast %3 : vector<1x256xf32> to vector<4x256xf32>
    %5 = arith.subf %1, %4 : vector<4x256xf32>
    %6 = math.exp %5 : vector<4x256xf32>
    %cst_2 = arith.constant dense<0.000000e+00> : vector<256xf32>
    %7 = vector.multi_reduction <add>, %6, %cst_2 [0] : vector<4x256xf32> to vector<256xf32>
    %8 = vector.shape_cast %7 : vector<256xf32> to vector<1x256xf32>
    %cst_3 = arith.constant 1.000000e+00 : f32
    %9 = vector.broadcast %cst_3 : f32 to vector<1x256xf32>
    %10 = arith.divf %9, %8 : vector<1x256xf32>
    %11 = tpu.iota {dimensions = array<i32: 0>} : vector<4x256xi32>
    %12 = vector.broadcast %3 : vector<1x256xf32> to vector<4x256xf32>
    %13 = arith.cmpf oeq, %1, %12 : vector<4x256xf32>
    %c4_i32 = arith.constant 4 : i32
    %14 = vector.broadcast %c4_i32 : i32 to vector<4x256xi32>
    %15 = arith.select %13, %11, %14 : vector<4x256xi1>, vector<4x256xi32>
    %cst_4 = arith.constant dense<2147483647> : vector<256xi32>
    %16 = vector.multi_reduction <minsi>, %15, %cst_4 [0] : vector<4x256xi32> to vector<256xi32>
    %17 = vector.shape_cast %16 : vector<256xi32> to vector<1x256xi32>
    %c0_5 = arith.constant 0 : index
    %c0_6 = arith.constant 0 : index
    %c0_7 = arith.constant 0 : index
    %18 = vector.load %arg3[%c0_5, %c0_6, %c0_7] : memref<1x1x256xi32, #tpu.memory_space<vmem>>, vector<1x1x256xi32>
    %19 = vector.shape_cast %18 : vector<1x1x256xi32> to vector<1x256xi32>
    %20 = arith.cmpi eq, %17, %19 : vector<1x256xi32>
    %21 = arith.extui %20 : vector<1x256xi1> to vector<1x256xi32>
    %22 = arith.sitofp %21 : vector<1x256xi32> to vector<1x256xf32>
    %23 = arith.subf %22, %10 : vector<1x256xf32>
    %c0_8 = arith.constant 0 : index
    %c0_9 = arith.constant 0 : index
    %c0_10 = arith.constant 0 : index
    %24 = vector.load %arg4[%c0_8, %c0_9, %c0_10] : memref<1x1x256xf32, #tpu.memory_space<vmem>>, vector<1x1x256xf32>
    %25 = vector.shape_cast %24 : vector<1x1x256xf32> to vector<1x256xf32>
    %26 = vector.shape_cast %23 : vector<1x256xf32> to vector<1x1x256xf32>
    tpu.vector_store %arg4[%c0_8, %c0_9, %c0_10], %26 {strides = array<i32>} : memref<1x1x256xf32, #tpu.memory_space<vmem>>, vector<1x1x256xf32>,
    %cst_11 = arith.constant -2.500000e+00 : f32
    %27 = vector.broadcast %cst_11 : f32 to vector<1x256xf32>
    %28 = arith.mulf %27, %10 : vector<1x256xf32>
    %29 = math.exp %28 : vector<1x256xf32>
    %c0_12 = arith.constant 0 : index
    %c0_13 = arith.constant 0 : index
    %c0_14 = arith.constant 0 : index
    %30 = vector.load %arg5[%c0_12, %c0_13, %c0_14] : memref<1x1x256xf32, #tpu.memory_space<vmem>>, vector<1x1x256xf32>
    %31 = vector.shape_cast %30 : vector<1x1x256xf32> to vector<1x256xf32>
    %32 = vector.shape_cast %29 : vector<1x256xf32> to vector<1x1x256xf32>
    tpu.vector_store %arg5[%c0_12, %c0_13, %c0_14], %32 {strides = array<i32>} : memref<1x1x256xf32, #tpu.memory_space<vmem>>, vector<1x1x256xf32>,
    %cst_15 = arith.constant 2.500000e+00 : f32
    %33 = vector.broadcast %cst_15 : f32 to vector<1x256xf32>
    %34 = arith.mulf %33, %10 : vector<1x256xf32>
    %35 = math.exp %34 : vector<1x256xf32>
    %c0_16 = arith.constant 0 : index
    %c0_17 = arith.constant 0 : index
    %c0_18 = arith.constant 0 : index
    %36 = vector.load %arg6[%c0_16, %c0_17, %c0_18] : memref<1x1x256xf32, #tpu.memory_space<vmem>>, vector<1x1x256xf32>
    %37 = vector.shape_cast %36 : vector<1x1x256xf32> to vector<1x256xf32>
    %38 = vector.shape_cast %35 : vector<1x256xf32> to vector<1x1x256xf32>
    tpu.vector_store %arg6[%c0_16, %c0_17, %c0_18], %38 {strides = array<i32>} : memref<1x1x256xf32, #tpu.memory_space<vmem>>, vector<1x1x256xf32>,
    return
  }
  func.func @transform_0(%arg0: i32, %arg1: i32) -> (i32, i32, i32) {
    %c0_i32 = arith.constant 0 : i32
    %c0_i32_0 = arith.constant 0 : i32
    return %arg0, %c0_i32, %arg1 : i32, i32, i32
  }
  func.func @transform_1(%arg0: i32, %arg1: i32) -> (i32, i32, i32) {
    %c0_i32 = arith.constant 0 : i32
    %c0_i32_0 = arith.constant 0 : i32
    return %arg0, %c0_i32, %arg1 : i32, i32, i32
  }
  func.func @transform_2(%arg0: i32, %arg1: i32) -> (i32, i32, i32) {
    %c0_i32 = arith.constant 0 : i32
    %c0_i32_0 = arith.constant 0 : i32
    return %arg0, %c0_i32, %arg1 : i32, i32, i32
  }
  func.func @transform_3(%arg0: i32, %arg1: i32) -> (i32, i32, i32) {
    %c0_i32 = arith.constant 0 : i32
    %c0_i32_0 = arith.constant 0 : i32
    return %arg0, %c0_i32, %arg1 : i32, i32, i32
  }
  func.func @transform_4(%arg0: i32, %arg1: i32) -> (i32, i32, i32) {
    %c0_i32 = arith.constant 0 : i32
    %c0_i32_0 = arith.constant 0 : i32
    return %arg0, %c0_i32, %arg1 : i32, i32, i32
  }
}

</mosaic_0001>

<llo_original>
// kernel: tpu_custom_call.1
$region0: #{tpu_custom_call.1}
  #allocation0 [shape = 'u32[]', space=smem, size = 0x4, offset = 0x4, fixed_abs, tag = 'smem constant byte address 0x4 - core index']
  #allocation1 [shape = 'u32[144,128]{1,0:T(1,128)}', space=vmem, size = 0x12000, scoped, tag = 'internal scratch']
  %s0 = inlined_call_operand.hbm [shape: f32[2,4,256], index: 0, kind: input, shape index: {}]
  %s1 = inlined_call_operand.hbm [shape: s32[2,1,256], index: 1, kind: input, shape index: {}]
  %s2 = inlined_call_operand.hbm [shape: f32[2,1,256], index: 2, kind: output, shape index: {0}]
  %s3 = inlined_call_operand.hbm [shape: f32[2,1,256], index: 3, kind: output, shape index: {1}]
  %s4 = inlined_call_operand.hbm [shape: f32[2,1,256], index: 4, kind: output, shape index: {2}]
  %5 = xla_tuple %s2, %s3, %s4
  %s6 = sld [smem:[#allocation0]]
  $region65: #{tpu_custom_call.1} parent=0
    _
  %s8 = ssub.s32 1, %s6
  %s9 = scalar_select 0, %s8, %s6
  $region1: #{tpu_custom_call.1} parent=0
    #allocation2 [shape = 'u8[8192]{0}', space=vmem, size = 0x2000, scoped, tag = 'input window, operand 0']
    #allocation3 [shape = 's32[2]{0}', space=sflag, size = 0x8, scoped, tag = 'scoped memory for tpu_custom_call.1']
    #allocation4 [shape = 's32[2]{0}', space=sflag, size = 0x8, scoped, tag = 'scoped memory for tpu_custom_call.1']
    #allocation5 [shape = 'u8[2048]{0}', space=vmem, size = 0x800, scoped, tag = 'input window, operand 1']
    #allocation6 [shape = 's32[2]{0}', space=sflag, size = 0x8, scoped, tag = 'scoped memory for tpu_custom_call.1']
    #allocation7 [shape = 'u8[2048]{0}', space=vmem, size = 0x800, scoped, tag = 'output window, operand 0']
    #allocation8 [shape = 'u8[2048]{0}', space=vmem, size = 0x800, scoped, tag = 'output window, operand 1']
    #allocation9 [shape = 's32[2]{0}', space=sflag, size = 0x8, scoped, tag = 'scoped memory for tpu_custom_call.1']
    #allocation10 [shape = 'u8[2048]{0}', space=vmem, size = 0x800, scoped, tag = 'output window, operand 2']
    %10 = vsyncpa [#allocation3], 0
    %s11 = scalar_lea.sflag [#allocation3], 1
    %12 = vsyncpa %s11, 0
    %13 = vsyncpa [#allocation6], 0
    %s14 = scalar_lea.sflag [#allocation6], 1
    %15 = vsyncpa %s14, 0
    %16 = vsyncpa [#allocation4], 0
    %s17 = scalar_lea.sflag [#allocation4], 1
    %18 = vsyncpa %s17, 0
    %19 = vsyncpa [#allocation9], 0
    %s20 = scalar_lea.sflag [#allocation9], 1
    %21 = vsyncpa %s20, 0
    loop: start=0, step=1, limit=4
    $region2: #{tpu_custom_call.1} parent=1 // loop_pre_header
      _
    $region3: #{tpu_custom_call.1} parent=1 // loop_header
      %s23 = sphi 0, %s27
      %p24 = scmp.ge.s32.totalorder %s23, 4
      %s30 = sphi 0, %s42
      %s31 = sphi 0, %s38
      %s32 = sphi 0, %s30
      %s33 = sphi 0, %s31
      %s34 = sphi 0, %s32
      %s35 = sphi 0, %s33
      %s47 = sphi 0, %s49
      %s50 = sphi 0, %s47
      %s51 = sphi 0, %s50
      %s67 = sphi 0, %s51
      %s75 = sphi 0, %s77
      %s78 = sphi 0, %s75
      %s79 = sphi 0, %s78
      %s95 = sphi 0, %s79
      %s103 = sphi 0, %s105
      %s106 = sphi 0, %s103
      %s107 = sphi 0, %s106
      %s123 = sphi 0, %s107
      %s131 = sphi 0, %s133
      %s134 = sphi 0, %s131
      %s135 = sphi 0, %s134
      %s151 = sphi 0, %s135
      %s159 = sphi 0, %s161
      %s162 = sphi 0, %s159
      %s163 = sphi 0, %s162
      %s179 = sphi 0, %s163
    $region4: #{tpu_custom_call.1} parent=1 // loop_header_branch
      %26 = sbr.rel (%p24) target = $region8
    $region5: #{tpu_custom_call.1} parent=1 // loop_body
      %s28 = ssub.s32 %s23, 1
      %s29 = ssub.s32 %s23, 2
      %s36 = sadd.s32 1, %s31
      %p37 = scmp.ge.s32.totalorder %s36, 1
      %s38 = scalar_select %p37, 0, %s36
      %s39 = sadd.s32 1, %s30
      %s40 = scalar_select %p37, %s39, %s30
      %p41 = scmp.ge.s32.totalorder %s40, 2
      %s42 = scalar_select %p41, 0, %s40
      %s43 = ssub.s32 %s30, %s42
      %s44 = ssub.s32 %s31, %s38
      %s45 = sor.u32 %s43, %s44
      %p46 = scmp.eq.s32.totalorder %s45, 0
      %s48 = sadd.s32 %s47, 1
      %s49 = scalar_select %p46, %s47, %s48
      %p52 = pneg %p46
      %p53 = scmp.eq.s32.totalorder %s23, 1
      %p54 = por %p52, %p53
      %p55 = scmp.ne.s32.totalorder %s47, %s50
      %p56 = scmp.eq.s32.totalorder %s23, 0
      %p57 = por %p55, %p56
      %p58 = scmp.ne.s32.totalorder %s47, %s50
      %p59 = scmp.eq.s32.totalorder %s28, 1
      %p60 = por %p58, %p59
      %p61 = scmp.ne.s32.totalorder %s50, %s51
      %p62 = scmp.eq.s32.totalorder %s28, 0
      %p63 = por %p61, %p62
      %p64 = scmp.ne.s32.totalorder %s50, %s51
      %p65 = scmp.eq.s32.totalorder %s29, 1
      %p66 = por %p64, %p65
      %p68 = scmp.ne.s32.totalorder %s51, %s67
      %p69 = scmp.eq.s32.totalorder %s29, 0
      %p70 = por %p68, %p69
      %s71 = ssub.s32 %s30, %s42
      %s72 = ssub.s32 %s31, %s38
      %s73 = sor.u32 %s71, %s72
      %p74 = scmp.eq.s32.totalorder %s73, 0
      %s76 = sadd.s32 %s75, 1
      %s77 = scalar_select %p74, %s75, %s76
      %p80 = pneg %p74
      %p81 = scmp.eq.s32.totalorder %s23, 1
      %p82 = por %p80, %p81
      %p83 = scmp.ne.s32.totalorder %s75, %s78
      %p84 = scmp.eq.s32.totalorder %s23, 0
      %p85 = por %p83, %p84
      %p86 = scmp.ne.s32.totalorder %s75, %s78
      %p87 = scmp.eq.s32.totalorder %s28, 1
      %p88 = por %p86, %p87
      %p89 = scmp.ne.s32.totalorder %s78, %s79
      %p90 = scmp.eq.s32.totalorder %s28, 0
      %p91 = por %p89, %p90
      %p92 = scmp.ne.s32.totalorder %s78, %s79
      %p93 = scmp.eq.s32.totalorder %s29, 1
      %p94 = por %p92, %p93
      %p96 = scmp.ne.s32.totalorder %s79, %s95
      %p97 = scmp.eq.s32.totalorder %s29, 0
      %p98 = por %p96, %p97
      %s99 = ssub.s32 %s30, %s42
      %s100 = ssub.s32 %s31, %s38
      %s101 = sor.u32 %s99, %s100
      %p102 = scmp.eq.s32.totalorder %s101, 0
      %s104 = sadd.s32 %s103, 1
      %s105 = scalar_select %p102, %s103, %s104
      %p108 = pneg %p102
      %p109 = scmp.eq.s32.totalorder %s23, 1
      %p110 = por %p108, %p109
      %p111 = scmp.ne.s32.totalorder %s103, %s106
      %p112 = scmp.eq.s32.totalorder %s23, 0
      %p113 = por %p111, %p112
      %p114 = scmp.ne.s32.totalorder %s103, %s106
      %p115 = scmp.eq.s32.totalorder %s28, 1
      %p116 = por %p114, %p115
      %p117 = scmp.ne.s32.totalorder %s106, %s107
      %p118 = scmp.eq.s32.totalorder %s28, 0
      %p119 = por %p117, %p118
      %p120 = scmp.ne.s32.totalorder %s106, %s107
      %p121 = scmp.eq.s32.totalorder %s29, 1
      %p122 = por %p120, %p121
      %p124 = scmp.ne.s32.totalorder %s107, %s123
      %p125 = scmp.eq.s32.totalorder %s29, 0
      %p126 = por %p124, %p125
      %s127 = ssub.s32 %s30, %s42
      %s128 = ssub.s32 %s31, %s38
      %s129 = sor.u32 %s127, %s128
      %p130 = scmp.eq.s32.totalorder %s129, 0
      %s132 = sadd.s32 %s131, 1
      %s133 = scalar_select %p130, %s131, %s132
      %p136 = pneg %p130
      %p137 = scmp.eq.s32.totalorder %s23, 1
      %p138 = por %p136, %p137
      %p139 = scmp.ne.s32.totalorder %s131, %s134
      %p140 = scmp.eq.s32.totalorder %s23, 0
      %p141 = por %p139, %p140
      %p142 = scmp.ne.s32.totalorder %s131, %s134
      %p143 = scmp.eq.s32.totalorder %s28, 1
      %p144 = por %p142, %p143
      %p145 = scmp.ne.s32.totalorder %s134, %s135
      %p146 = scmp.eq.s32.totalorder %s28, 0
      %p147 = por %p145, %p146
      %p148 = scmp.ne.s32.totalorder %s134, %s135
      %p149 = scmp.eq.s32.totalorder %s29, 1
      %p150 = por %p148, %p149
      %p152 = scmp.ne.s32.totalorder %s135, %s151
      %p153 = scmp.eq.s32.totalorder %s29, 0
      %p154 = por %p152, %p153
      %s155 = ssub.s32 %s30, %s42
      %s156 = ssub.s32 %s31, %s38
      %s157 = sor.u32 %s155, %s156
      %p158 = scmp.eq.s32.totalorder %s157, 0
      %s160 = sadd.s32 %s159, 1
      %s161 = scalar_select %p158, %s159, %s160
      %p164 = pneg %p158
      %p165 = scmp.eq.s32.totalorder %s23, 1
      %p166 = por %p164, %p165
      %p167 = scmp.ne.s32.totalorder %s159, %s162
      %p168 = scmp.eq.s32.totalorder %s23, 0
      %p169 = por %p167, %p168
      %p170 = scmp.ne.s32.totalorder %s159, %s162
      %p171 = scmp.eq.s32.totalorder %s28, 1
      %p172 = por %p170, %p171
      %p173 = scmp.ne.s32.totalorder %s162, %s163
      %p174 = scmp.eq.s32.totalorder %s28, 0
      %p175 = por %p173, %p174
      %p176 = scmp.ne.s32.totalorder %s162, %s163
      %p177 = scmp.eq.s32.totalorder %s29, 1
      %p178 = por %p176, %p177
      %p180 = scmp.ne.s32.totalorder %s163, %s179
      %p181 = scmp.eq.s32.totalorder %s29, 0
      %p182 = por %p180, %p181
      %p183 = scmp.le.s32.totalorder 1, %s23
      %p184 = scmp.lt.s32.totalorder %s23, 3
      %p185 = pnand %p183, %p184
      %p186 = pneg %p185
      // Predicated region
      $region9: #{tpu_custom_call.1} parent=5 // pred_check
        _
      $region10: #{tpu_custom_call.1} parent=5 // pred_check_branch
        %188 = sbr.rel (%p185) target = $region12
      $region11: #{tpu_custom_call.1} parent=5 // pred_region
        %s189 = ssub.s32 %s23, 1
      $region12: #{tpu_custom_call.1} parent=5 // pred_fallthru
        _
      %p190 = scmp.lt.s32.totalorder %s23, 2
      // Predicated region
      $region13: #{tpu_custom_call.1} parent=5 // pred_check
        %p191 = pneg %p190
      $region14: #{tpu_custom_call.1} parent=5 // pred_check_branch
        %193 = sbr.rel (%p191) target = $region16
      $region15: #{tpu_custom_call.1} parent=5 // pred_region
        // Predicated region
        $region17: #{tpu_custom_call.1} parent=15 // pred_check
          %p194 = pneg %p57
        $region18: #{tpu_custom_call.1} parent=15 // pred_check_branch
          %196 = sbr.rel (%p194) target = $region20
        $region19: #{tpu_custom_call.1} parent=15 // pred_region
          %s197 = sand.u32 %s47, 1
          %s198 = scalar_lea.sflag [#allocation3], %s197
          %s199 = sand.u32 %s47, 1
          %s200 = smul.addr %s199, 8
          %s201 = scalar_lea.vmem [#allocation2], %s200
          %s202 = smul.u32 2, %s31
          %s204 = ssub.s32 128, 128
          %205 = vsyncadd %s198, %s204
          %s206 = smul.addr %s30, 2
          %s207 = sadd.s32 %s202, %s206
          %s208 = smul.addr %s207, 64
          %s209 = scalar_lea.hbm %s0, %s208
          %s211 = sshll.u32 %s201, 4
          %s212 = int_to_ptr.vmem [resolvable:$true] %s211
          %214 = dma.hbm_to_vmem [thread:$0]  %s209, 128, %s212, %s198
        $region20: #{tpu_custom_call.1} parent=15 // pred_fallthru
          _
        // Predicated region
        $region21: #{tpu_custom_call.1} parent=15 // pred_check
          %p215 = pneg %p85
        $region22: #{tpu_custom_call.1} parent=15 // pred_check_branch
          %217 = sbr.rel (%p215) target = $region24
        $region23: #{tpu_custom_call.1} parent=15 // pred_region
          %s218 = sand.u32 %s75, 1
          %s219 = scalar_lea.sflag [#allocation6], %s218
          %s220 = sand.u32 %s75, 1
          %s221 = smul.addr %s220, 2
          %s222 = scalar_lea.vmem [#allocation5], %s221
          %s223 = smul.u32 2, %s31
          %s225 = ssub.s32 32, 32
          %226 = vsyncadd %s219, %s225
          %s227 = smul.addr %s30, 2
          %s228 = sadd.s32 %s223, %s227
          %s229 = smul.addr %s228, 16
          %s230 = scalar_lea.hbm %s1, %s229
          %s232 = sshll.u32 %s222, 4
          %s233 = int_to_ptr.vmem [resolvable:$true] %s232
          %235 = dma.hbm_to_vmem [thread:$0]  %s230, 32, %s233, %s219
        $region24: #{tpu_custom_call.1} parent=15 // pred_fallthru
          _
      $region16: #{tpu_custom_call.1} parent=5 // pred_fallthru
        _
      %p236 = scmp.le.s32.totalorder 1, %s23
      %p237 = scmp.lt.s32.totalorder %s23, 3
      %p238 = pnand %p236, %p237
      %p239 = pneg %p238
      // Predicated region
      $region25: #{tpu_custom_call.1} parent=5 // pred_check
        _
      $region26: #{tpu_custom_call.1} parent=5 // pred_check_branch
        %241 = sbr.rel (%p238) target = $region28
      $region27: #{tpu_custom_call.1} parent=5 // pred_region
        %s242 = ssub.s32 %s23, 1
        %s243 = sand.u32 %s50, 1
        %s244 = scalar_lea.sflag [#allocation3], %s243
        %s245 = sand.u32 %s50, 1
        %s246 = smul.addr %s245, 8
        %s247 = scalar_lea.vmem [#allocation2], %s246
        // Predicated region
        $region29: #{tpu_custom_call.1} parent=27 // pred_check
          %p248 = pneg %p63
        $region30: #{tpu_custom_call.1} parent=27 // pred_check_branch
          %250 = sbr.rel (%p248) target = $region32
        $region31: #{tpu_custom_call.1} parent=27 // pred_region
          %251 = dma.done %s244, 128
        $region32: #{tpu_custom_call.1} parent=27 // pred_fallthru
          _
        %s252 = sand.u32 %s78, 1
        %s253 = scalar_lea.sflag [#allocation6], %s252
        %s254 = sand.u32 %s78, 1
        %s255 = smul.addr %s254, 2
        %s256 = scalar_lea.vmem [#allocation5], %s255
        // Predicated region
        $region33: #{tpu_custom_call.1} parent=27 // pred_check
          %p257 = pneg %p91
        $region34: #{tpu_custom_call.1} parent=27 // pred_check_branch
          %259 = sbr.rel (%p257) target = $region36
        $region35: #{tpu_custom_call.1} parent=27 // pred_region
          %260 = dma.done %s253, 32
        $region36: #{tpu_custom_call.1} parent=27 // pred_fallthru
          _
        %s261 = sand.u32 %s50, 1
        %s262 = scalar_lea.sflag [#allocation3], %s261
        %s263 = sand.u32 %s50, 1
        %s264 = smul.addr %s263, 8
        %s265 = scalar_lea.vmem [#allocation2], %s264
        %p266 = pneg %p63
        %p267 = pneg %p60
        %s268 = sand.u32 %s78, 1
        %s269 = scalar_lea.sflag [#allocation6], %s268
        %s270 = sand.u32 %s78, 1
        %s271 = smul.addr %s270, 2
        %s272 = scalar_lea.vmem [#allocation5], %s271
        %p273 = pneg %p91
        %p274 = pneg %p88
        %p275 = pneg %p119
        %p276 = pneg %p116
        %s277 = sand.u32 %s106, 1
        %s278 = scalar_lea.sflag [#allocation4], %s277
        %s279 = sand.u32 %s106, 1
        %s280 = smul.addr %s279, 2
        %s281 = scalar_lea.vmem [#allocation7], %s280
        %p282 = pneg %p147
        %p283 = pneg %p144
        %s284 = sand.u32 %s28, 1
        %s285 = scalar_lea.sflag [#allocation9], %s284
        %s286 = sand.u32 %s134, 1
        %s287 = smul.addr %s286, 2
        %s288 = scalar_lea.vmem [#allocation8], %s287
        %p289 = pneg %p175
        %p290 = pneg %p172
        %s291 = sand.u32 %s28, 1
        %s292 = scalar_lea.sflag [#allocation9], %s291
        %s293 = sand.u32 %s162, 1
        %s294 = smul.addr %s293, 2
        %s295 = scalar_lea.vmem [#allocation10], %s294
        %s296 = smul.u32 2, %s33
        %s297 = smul.u32 2, %s33
        %s298 = smul.u32 2, %s33
        %s299 = smul.u32 2, %s33
        %s300 = smul.u32 2, %s33
        %v301 = vld [vmem:[%s247] sm:$0xff]
        %v303 = vcombine.high %v301, %v301
        %vm305 = vcmask 1043456
        %v306 = vsel %vm305, %v301, -inf
        %v307 = vrot.slane %v306, 4
        %v308 = vmax.f32 %v306, %v307
        %v309 = vrot.slane %v308, 2
        %v310 = vmax.f32 %v308, %v309
        %v311 = vrot.slane %v310, 1
        %v312 = vmax.f32 %v310, %v311
        %v313 = vsel %vm305, %v303, -inf
        %v314 = vrot.slane %v313, 4
        %v315 = vmax.f32 %v313, %v314
        %v316 = vrot.slane %v315, 2
        %v317 = vmax.f32 %v315, %v316
        %v318 = vrot.slane %v317, 1
        %v319 = vmax.f32 %v317, %v318
        %v322 = vcombine.low %v312, %v319
        %v324 = vsub.f32 %v301, %v322
        %v325 = vmul.f32 %v324, 1.442695
        %v326 = vpow.pop %v325
        %v328 = vcombine.high %v326, %v326
        %v330 = vsel %vm305, %v326, 0.0
        %v331 = vrot.slane %v330, 4
        %v332 = vadd.f32 %v330, %v331
        %v333 = vrot.slane %v332, 2
        %v334 = vadd.f32 %v332, %v333
        %v335 = vrot.slane %v334, 1
        %v336 = vadd.f32 %v334, %v335
        %v337 = vsel %vm305, %v328, 0.0
        %v338 = vrot.slane %v337, 4
        %v339 = vadd.f32 %v337, %v338
        %v340 = vrot.slane %v339, 2
        %v341 = vadd.f32 %v339, %v340
        %v342 = vrot.slane %v341, 1
        %v343 = vadd.f32 %v341, %v342
        %v344 = vrcp.pop %v336
        %v345 = vmul.f32 1.0, %v344
        %v346 = vrcp.pop %v343
        %v347 = vmul.f32 1.0, %v346
        %v348 = vlaneseq
        %v349 = vshrl.u32 %v348, 7
        %vm350 = vcmp.eq.f32.partialorder %v301, %v322
        %v352 = vunpack.c.l.s4 839922192
        %v353 = vunpack.c.0.s8 %v352
        %v354 = vlaneseq
        %v355 = vshrl.u32 %v354, 7
        %v356 = vsub.s32 %v353, %v355
        %v357 = vrot.slane %v349, %v356
        %v358 = vsel %vm350, %v357, 4
        %v359 = vcombine.high %v358, %v358
        %v360 = vsel %vm305, %v358, 2147483647
        %v361 = vrot.slane %v360, 4
        %vm362 = vcmp.lt.s32.totalorder %v360, %v361
        %v363 = vsel %vm362, %v360, %v361
        %v364 = vrot.slane %v363, 2
        %vm365 = vcmp.lt.s32.totalorder %v363, %v364
        %v366 = vsel %vm365, %v363, %v364
        %v367 = vrot.slane %v366, 1
        %vm368 = vcmp.lt.s32.totalorder %v366, %v367
        %v369 = vsel %vm368, %v366, %v367
        %v370 = vsel %vm305, %v359, 2147483647
        %v371 = vrot.slane %v370, 4
        %vm372 = vcmp.lt.s32.totalorder %v370, %v371
        %v373 = vsel %vm372, %v370, %v371
        %v374 = vrot.slane %v373, 2
        %vm375 = vcmp.lt.s32.totalorder %v373, %v374
        %v376 = vsel %vm375, %v373, %v374
        %v377 = vrot.slane %v376, 1
        %vm378 = vcmp.lt.s32.totalorder %v376, %v377
        %v379 = vsel %vm378, %v376, %v377
        %v380 = vld [vmem:[%s256] sm:$0x3]
        %v381 = vlaneseq
        %v382 = vshrl.u32 %v381, 7
        %v383 = vsub.s32 0, %v382
        %v384 = vrot.slane %v380, %v383
        %v385 = vlaneseq
        %v386 = vshrl.u32 %v385, 7
        %v387 = vsub.s32 1, %v386
        %v388 = vrot.slane %v380, %v387
        %vm389 = vcmp.eq.s32.totalorder %v369, %v384
        %vm390 = vcmp.eq.s32.totalorder %v379, %v388
        %v391 = vsel %vm389, 1, 0
        %v392 = vsel %vm390, 1, 0
        %v393 = vcvt.s32.f32 %v391
        %v394 = vcvt.s32.f32 %v392
        %v395 = vsub.f32 %v393, %v345
        %v396 = vsub.f32 %v394, %v347
        %v399 = vcombine.low %v395, %v396
        %v401 = vunpack.c.l.s4 1966171168
        %v402 = vunpack.c.0.s8 %v401
        %v403 = vlaneseq
        %v404 = vshrl.u32 %v403, 7
        %v405 = vsub.s32 %v402, %v404
        %v406 = vrot.slane %v399, %v405
        %v408 = vunpack.c.l.s4 1966171168
        %v409 = vunpack.c.0.s8 %v408
        %v410 = vlaneseq
        %v411 = vshrl.u32 %v410, 7
        %v412 = vsub.s32 %v409, %v411
        %v413 = vrot.slane %v406, %v412
        %v415 = vlaneseq
        %vm416 = vcmp.ge.s32.totalorder %v415, 0
        %vm417 = vcmp.lt.s32.totalorder %v415, 256
        %vm418 = vmand %vm416, %vm417
        %419 = vst.msk [vmem:[%s281] sm:$0x3] %vm418, %v413
        %v420 = vmul.f32 %v345, -2.5
        %v421 = vmul.f32 %v347, -2.5
        %v422 = vmul.f32 %v420, 1.442695
        %v423 = vpow.pop %v422
        %v424 = vmul.f32 %v421, 1.442695
        %v425 = vpow.pop %v424
        %v428 = vcombine.low %v423, %v425
        %v430 = vunpack.c.l.s4 1966171168
        %v431 = vunpack.c.0.s8 %v430
        %v432 = vlaneseq
        %v433 = vshrl.u32 %v432, 7
        %v434 = vsub.s32 %v431, %v433
        %v435 = vrot.slane %v428, %v434
        %v437 = vunpack.c.l.s4 1966171168
        %v438 = vunpack.c.0.s8 %v437
        %v439 = vlaneseq
        %v440 = vshrl.u32 %v439, 7
        %v441 = vsub.s32 %v438, %v440
        %v442 = vrot.slane %v435, %v441
        %444 = vst.msk [vmem:[%s288] sm:$0x3] %vm418, %v442
        %v445 = vmul.f32 %v345, 2.5
        %v446 = vmul.f32 %v347, 2.5
        %v447 = vmul.f32 %v445, 1.442695
        %v448 = vpow.pop %v447
        %v449 = vmul.f32 %v446, 1.442695
        %v450 = vpow.pop %v449
        %v453 = vcombine.low %v448, %v450
        %v455 = vunpack.c.l.s4 1966171168
        %v456 = vunpack.c.0.s8 %v455
        %v457 = vlaneseq
        %v458 = vshrl.u32 %v457, 7
        %v459 = vsub.s32 %v456, %v458
        %v460 = vrot.slane %v453, %v459
        %v462 = vunpack.c.l.s4 1966171168
        %v463 = vunpack.c.0.s8 %v462
        %v464 = vlaneseq
        %v465 = vshrl.u32 %v464, 7
        %v466 = vsub.s32 %v463, %v465
        %v467 = vrot.slane %v460, %v466
        %469 = vst.msk [vmem:[%s295] sm:$0x3] %vm418, %v467
        %s470 = sand.u32 %s106, 1
        %s471 = scalar_lea.sflag [#allocation4], %s470
        %s472 = sand.u32 %s106, 1
        %s473 = smul.addr %s472, 2
        %s474 = scalar_lea.vmem [#allocation7], %s473
        %s475 = sand.u32 %s28, 1
        %s476 = scalar_lea.sflag [#allocation9], %s475
        %s477 = sand.u32 %s134, 1
        %s478 = smul.addr %s477, 2
        %s479 = scalar_lea.vmem [#allocation8], %s478
        %s480 = sand.u32 %s28, 1
        %s481 = scalar_lea.sflag [#allocation9], %s480
        %s482 = sand.u32 %s162, 1
        %s483 = smul.addr %s482, 2
        %s484 = scalar_lea.vmem [#allocation10], %s483
        // Predicated region
        $region37: #{tpu_custom_call.1} parent=27 // pred_check
          %p485 = pneg %p116
        $region38: #{tpu_custom_call.1} parent=27 // pred_check_branch
          %487 = sbr.rel (%p485) target = $region40
        $region39: #{tpu_custom_call.1} parent=27 // pred_region
          %s488 = smul.u32 2, %s33
          %s490 = ssub.s32 32, 32
          %491 = vsyncadd %s471, %s490
          %s492 = smul.addr %s32, 2
          %s493 = sadd.s32 %s488, %s492
          %s494 = smul.addr %s493, 16
          %s495 = scalar_lea.hbm %s2, %s494
          %s497 = sshll.u32 %s474, 4
          %s498 = int_to_ptr.vmem [resolvable:$true] %s497
          %500 = dma.vmem_to_hbm [thread:$0]  %s498, 32, %s495, %s471
        $region40: #{tpu_custom_call.1} parent=27 // pred_fallthru
          _
        // Predicated region
        $region41: #{tpu_custom_call.1} parent=27 // pred_check
          %p501 = pneg %p144
        $region42: #{tpu_custom_call.1} parent=27 // pred_check_branch
          %503 = sbr.rel (%p501) target = $region44
        $region43: #{tpu_custom_call.1} parent=27 // pred_region
          %s504 = smul.u32 2, %s33
          %s506 = ssub.s32 32, 32
          %507 = vsyncadd %s476, %s506
          %s508 = smul.addr %s32, 2
          %s509 = sadd.s32 %s504, %s508
          %s510 = smul.addr %s509, 16
          %s511 = scalar_lea.hbm %s3, %s510
          %s513 = sshll.u32 %s479, 4
          %s514 = int_to_ptr.vmem [resolvable:$true] %s513
          %516 = dma.vmem_to_hbm [thread:$0]  %s514, 32, %s511, %s476
        $region44: #{tpu_custom_call.1} parent=27 // pred_fallthru
          _
        // Predicated region
        $region45: #{tpu_custom_call.1} parent=27 // pred_check
          %p517 = pneg %p172
        $region46: #{tpu_custom_call.1} parent=27 // pred_check_branch
          %519 = sbr.rel (%p517) target = $region48
        $region47: #{tpu_custom_call.1} parent=27 // pred_region
          %s520 = smul.u32 2, %s33
          %s522 = ssub.s32 32, 32
          %523 = vsyncadd %s481, %s522
          %s524 = smul.addr %s32, 2
          %s525 = sadd.s32 %s520, %s524
          %s526 = smul.addr %s525, 16
          %s527 = scalar_lea.hbm %s4, %s526
          %s529 = sshll.u32 %s484, 4
          %s530 = int_to_ptr.vmem [resolvable:$true] %s529
          %532 = dma.vmem_to_hbm [thread:$0]  %s530, 32, %s527, %s481
        $region48: #{tpu_custom_call.1} parent=27 // pred_fallthru
          _
      $region28: #{tpu_custom_call.1} parent=5 // pred_fallthru
        _
      %p533 = scmp.le.s32.totalorder 2, %s23
      // Predicated region
      $region49: #{tpu_custom_call.1} parent=5 // pred_check
        %p534 = pneg %p533
      $region50: #{tpu_custom_call.1} parent=5 // pred_check_branch
        %536 = sbr.rel (%p534) target = $region52
      $region51: #{tpu_custom_call.1} parent=5 // pred_region
        %s537 = ssub.s32 %s23, 2
        // Predicated region
        $region53: #{tpu_custom_call.1} parent=51 // pred_check
          %p538 = pneg %p122
        $region54: #{tpu_custom_call.1} parent=51 // pred_check_branch
          %540 = sbr.rel (%p538) target = $region56
        $region55: #{tpu_custom_call.1} parent=51 // pred_region
          %s541 = sand.u32 %s107, 1
          %s542 = scalar_lea.sflag [#allocation4], %s541
          %s543 = sand.u32 %s107, 1
          %s544 = smul.addr %s543, 2
          %s545 = scalar_lea.vmem [#allocation7], %s544
          %546 = dma.done %s542, 32
        $region56: #{tpu_custom_call.1} parent=51 // pred_fallthru
          _
        // Predicated region
        $region57: #{tpu_custom_call.1} parent=51 // pred_check
          %p547 = pneg %p150
        $region58: #{tpu_custom_call.1} parent=51 // pred_check_branch
          %549 = sbr.rel (%p547) target = $region60
        $region59: #{tpu_custom_call.1} parent=51 // pred_region
          %s550 = sand.u32 %s29, 1
          %s551 = scalar_lea.sflag [#allocation9], %s550
          %s552 = sand.u32 %s135, 1
          %s553 = smul.addr %s552, 2
          %s554 = scalar_lea.vmem [#allocation8], %s553
          %555 = dma.done %s551, 32
        $region60: #{tpu_custom_call.1} parent=51 // pred_fallthru
          _
        // Predicated region
        $region61: #{tpu_custom_call.1} parent=51 // pred_check
          %p556 = pneg %p178
        $region62: #{tpu_custom_call.1} parent=51 // pred_check_branch
          %558 = sbr.rel (%p556) target = $region64
        $region63: #{tpu_custom_call.1} parent=51 // pred_region
          %s559 = sand.u32 %s29, 1
          %s560 = scalar_lea.sflag [#allocation9], %s559
          %s561 = sand.u32 %s163, 1
          %s562 = smul.addr %s561, 2
          %s563 = scalar_lea.vmem [#allocation10], %s562
          %564 = dma.done %s560, 32
        $region64: #{tpu_custom_call.1} parent=51 // pred_fallthru
          _
      $region52: #{tpu_custom_call.1} parent=5 // pred_fallthru
        _
    $region6: #{tpu_custom_call.1} parent=1 // loop_footer
      %s27 = sadd.s32 1, %s23
    $region7: #{tpu_custom_call.1} parent=1 // loop_footer_branch
      %22 = sbr.rel target = $region3
    $region8: #{tpu_custom_call.1} parent=1 // loop_exit
      _
    %565 = vsyncpa [#allocation3], 1
    %s566 = scalar_lea.sflag [#allocation3], 1
    %567 = vsyncpa %s566, 1
    %568 = vsyncpa [#allocation6], 1
    %s569 = scalar_lea.sflag [#allocation6], 1
    %570 = vsyncpa %s569, 1
    %571 = vsyncpa [#allocation4], 1
    %s572 = scalar_lea.sflag [#allocation4], 1
    %573 = vsyncpa %s572, 1
    %574 = vsyncpa [#allocation9], 1
    %s575 = scalar_lea.sflag [#allocation9], 1
    %576 = vsyncpa %s575, 1

</llo_original>
